<compile_context>
chip_gen: v7x
topology: tpu7x:2x2x1
jax: 0.10.0
libtpu: 0.0.40
codegen_flags: <defaults>
</compile_context>

<pallas_src>
import functools
import math

import jax
import jax.numpy as jnp
from jax import lax
from jax.experimental import pallas as pl
from jax.experimental.pallas import tpu as pltpu

EPSILON = 0.0001
SQRT_PI_OVER_2 = math.sqrt(math.pi / 2)
_NEG_BIG = -1e30   # effectively -inf, avoids inf-inf NaN traps in the online LSE


def _round_up(x, m):
    return (x + m - 1) // m * m


def _spectrum_kernel(scal_ref, z_ref, out_ref, m_scratch, l_scratch,
                     *, tile_s, num_valid_samples):
    """One (TS, TB) tile of the Monte-Carlo log-likelihood + online logsumexp.

    scal_ref : (8, TB) f32       rows: 0=alt, 1=ref, 2=comb - log(S), 3=sigma
    z_ref    : (TS, TB) f32/bf16 normal samples (sample axis on sublanes)
    out_ref  : (1, TB) f32       per-batch log density (batch lane-dense)
    m/l      : (1, TB) f32       running max / running sum-of-exp scratch
    """
    si = pl.program_id(1)

    @pl.when(si == 0)
    def _init():
        m_scratch[...] = jnp.full_like(m_scratch, _NEG_BIG)
        l_scratch[...] = jnp.zeros_like(l_scratch)

    scal = scal_ref[...]                       # (8, TB)
    alt = scal[0:1, :]                         # (1, TB)
    ref = scal[1:2, :]                         # (1, TB)
    sigma = scal[3:4, :]                       # (1, TB) broadcast of the scalar

    z = jnp.abs(z_ref[...].astype(jnp.float32))             # (TS, TB)
    t = jnp.tanh(sigma * z)                                  # EUP (binding slot)
    c = 1.0 - 2.0 * EPSILON
    fractions = EPSILON + c * t
    one_minus_fractions = EPSILON + c * (1.0 - t)            # = 1 - fractions

    log_lik = alt * jnp.log(fractions) + ref * jnp.log(one_minus_fractions)

    if num_valid_samples % tile_s != 0:        # static: mask padded sample rows
        row = si * tile_s + lax.broadcasted_iota(jnp.int32, log_lik.shape, 0)
        log_lik = jnp.where(row < num_valid_samples, log_lik, _NEG_BIG)

    # online logsumexp over the sample (sublane) axis
    m_prev = m_scratch[...]
    m_new = jnp.maximum(m_prev, jnp.max(log_lik, axis=0, keepdims=True))
    l_scratch[...] = (jnp.exp(m_prev - m_new) * l_scratch[...]
                      + jnp.sum(jnp.exp(log_lik - m_new), axis=0, keepdims=True))
    m_scratch[...] = m_new

    @pl.when(si == pl.num_programs(1) - 1)
    def _finalize():
        comb = scal_ref[2:3, :]                # already includes -log(num_samples)
        out_ref[...] = comb + m_scratch[...] + jnp.log(l_scratch[...])


def normal_seq_error_spectrum_fwd(alt_counts_1d, ref_counts_1d, normal_samples,
                                  mean_pre_sigmoid, max_mean,
                                  *, samples_layout="bs", store_z_bf16=False,
                                  tile_b=None, tile_s=None):
    """JAX wrapper mirroring NormalSeqErrorSpectrum.forward.

    samples_layout: "bs" -> normal_samples is (batch, num_samples) (PyTorch layout,
                    transposed in the wrapper); "sb" -> already (num_samples, batch)
                    (kernel-friendly layout, no wrapper transpose).
    """
    batch = alt_counts_1d.shape[0]

    alt = alt_counts_1d.astype(jnp.float32)
    ref = ref_counts_1d.astype(jnp.float32)

    # ---- layout plumbing (pure data movement, no math) ----
    if samples_layout == "bs":
        num_samples = normal_samples.shape[1]
        z = jnp.transpose(normal_samples.astype(jnp.float32))   # (S, B)
    elif samples_layout == "sb":
        num_samples = normal_samples.shape[0]
        z = normal_samples.astype(jnp.float32)                   # already (S, B)
    else:
        raise ValueError(f"unknown samples_layout {samples_layout!r}")

    # parameter -> scalar sigma (glue)
    actual_mean = jax.nn.sigmoid(mean_pre_sigmoid) * max_mean
    actual_sigma = (SQRT_PI_OVER_2 * actual_mean).astype(jnp.float32)

    # combinatorial term with -log(S) folded in (per-batch scalar, O(B) glue)
    comb = (lax.lgamma(alt + ref + 1.0) - lax.lgamma(alt + 1.0)
            - lax.lgamma(ref + 1.0)) - math.log(num_samples)

    # ---- tile sizing (lane = batch, sublane = samples) ----
    if tile_b is None:
        tile_b = min(_round_up(batch, 128), 1024)
    assert tile_b % 128 == 0
    b_pad = _round_up(batch, tile_b)

    if tile_s is None:
        max_tile_elems = 1024 * 1024                 # 4 MiB f32 z tile: v7x-safe 2x-buffered
        ts_cap = max(16, (max_tile_elems // tile_b) // 16 * 16)
        tile_s = min(_round_up(num_samples, 16), ts_cap, 2048)
    assert tile_s % 16 == 0
    s_pad = _round_up(num_samples, tile_s)

    z = jnp.pad(z, ((0, s_pad - num_samples), (0, b_pad - batch)))
    if store_z_bf16:
        z = z.astype(jnp.bfloat16)

    # packed per-batch scalars: one (8, B_pad) tile instead of 3 (B,1) tiles + SMEM scalar
    scal = jnp.zeros((8, b_pad), jnp.float32)
    scal = scal.at[0, :batch].set(alt)
    scal = scal.at[1, :batch].set(ref)
    scal = scal.at[2, :batch].set(comb)
    scal = scal.at[3, :].set(actual_sigma)

    grid = (b_pad // tile_b, s_pad // tile_s)
    kernel = functools.partial(_spectrum_kernel, tile_s=tile_s,
                               num_valid_samples=num_samples)

    out = pl.pallas_call(
        kernel,
        out_shape=jax.ShapeDtypeStruct((1, b_pad), jnp.float32),
        grid_spec=pltpu.PrefetchScalarGridSpec(
            num_scalar_prefetch=0,
            grid=grid,
            in_specs=[
                pl.BlockSpec((8, tile_b), lambda bi, si: (0, bi)),        # packed scalars
                pl.BlockSpec((tile_s, tile_b), lambda bi, si: (si, bi)),  # z samples
            ],
            out_specs=pl.BlockSpec((1, tile_b), lambda bi, si: (0, bi)),
            scratch_shapes=[pltpu.VMEM((1, tile_b), jnp.float32),   # running max
                            pltpu.VMEM((1, tile_b), jnp.float32)],  # running sum-of-exp
        ),
        compiler_params=pltpu.CompilerParams(
            dimension_semantics=("parallel", "arbitrary"),
            vmem_limit_bytes=32 * 1024 * 1024),
    )(scal, z)

    return out[0, :batch]


def _reference_jax(alt, ref, z, mean_pre_sigmoid, max_mean):
    """Pure-JAX reference mirroring the PyTorch module (z is (B, S))."""
    alt = alt.astype(jnp.float32)
    ref = ref.astype(jnp.float32)
    mean = jax.nn.sigmoid(mean_pre_sigmoid) * max_mean
    sigma = SQRT_PI_OVER_2 * mean
    f = EPSILON + (1 - 2 * EPSILON) * jnp.tanh(sigma * jnp.abs(z))
    ll = alt[:, None] * jnp.log(f) + ref[:, None] * jnp.log(1 - f)
    lse = jax.scipy.special.logsumexp(ll, axis=1) - math.log(z.shape[1])
    comb = (lax.lgamma(alt + ref + 1.0) - lax.lgamma(alt + 1.0)
            - lax.lgamma(ref + 1.0))
    return comb + lse


if __name__ == "__main__":
    # module hyper-parameters (deterministic, in-script)
    max_mean = 0.1
    mean_pre_sigmoid = jnp.float32(0.0)   # nn.Parameter initialized to 0.0

    key = jax.random.PRNGKey(0)

    # --- test 1: small single-tile case (B=8, S=128) ---
    k_alt, k_ref, k_z, key = jax.random.split(key, 4)
    b1, s1 = 8, 128
    alt1 = jax.random.randint(k_alt, (b1,), 0, 10).astype(jnp.float32)
    ref1 = jax.random.randint(k_ref, (b1,), 5, 50).astype(jnp.float32)
    # TODO(synk): torch.randn is stateful host RNG; samples drawn via jax.random instead.
    z1 = jax.random.normal(k_z, (b1, s1), dtype=jnp.float32)

    out1 = jax.block_until_ready(normal_seq_error_spectrum_fwd(
        alt1, ref1, z1, mean_pre_sigmoid, max_mean))
    exp1 = _reference_jax(alt1, ref1, z1, mean_pre_sigmoid, max_mean)
    assert out1.shape == (b1,)
    assert jnp.allclose(out1, exp1, rtol=1e-4, atol=1e-4), (out1, exp1)

    # --- test 2: exercises the (parallel, arbitrary) grid, batch/sample padding,
    #             masked last sample block, and the online logsumexp ---
    k_alt, k_ref, k_z, key = jax.random.split(key, 4)
    b2, s2 = 200, 200
    alt2 = jax.random.randint(k_alt, (b2,), 0, 10).astype(jnp.float32)
    ref2 = jax.random.randint(k_ref, (b2,), 5, 50).astype(jnp.float32)
    z2 = jax.random.normal(k_z, (b2, s2), dtype=jnp.float32)

    out2 = jax.block_until_ready(normal_seq_error_spectrum_fwd(
        alt2, ref2, z2, mean_pre_sigmoid, max_mean, tile_b=128, tile_s=32))
    exp2 = _reference_jax(alt2, ref2, z2, mean_pre_sigmoid, max_mean)
    assert out2.shape == (b2,)
    assert jnp.allclose(out2, exp2, rtol=1e-4, atol=1e-4), (out2, exp2)

    # --- test 3: bf16 z storage option (halves HBM read on v5e/v6e);
    #             compared against a reference fed the same bf16-quantized z ---
    z2_q = z2.astype(jnp.bfloat16).astype(jnp.float32)
    out3 = jax.block_until_ready(normal_seq_error_spectrum_fwd(
        alt2, ref2, z2, mean_pre_sigmoid, max_mean,
        store_z_bf16=True, tile_b=128, tile_s=32))
    exp3 = _reference_jax(alt2, ref2, z2_q, mean_pre_sigmoid, max_mean)
    assert jnp.allclose(out3, exp3, rtol=1e-4, atol=1e-4), (out3, exp3)

    # --- test 4: kernel-friendly (S, B) input layout -> no wrapper-side transpose;
    #             must match the (B, S) path bit-for-bit semantics ---
    out4 = jax.block_until_ready(normal_seq_error_spectrum_fwd(
        alt2, ref2, jnp.transpose(z2), mean_pre_sigmoid, max_mean,
        samples_layout="sb", tile_b=128, tile_s=32))
    assert jnp.allclose(out4, exp2, rtol=1e-4, atol=1e-4), (out4, exp2)

    print("KERNEL_OK")
</pallas_src>

<mosaic_0001>
module attributes {stable_mosaic.version = 11 : i64} {
  func.func @_spectrum_kernel(%arg0: i32, %arg1: i32, %arg2: memref<8x128xf32, #tpu.memory_space<vmem>>, %arg3: memref<128x128xf32, #tpu.memory_space<vmem>>, %arg4: memref<1x128xf32, #tpu.memory_space<vmem>>, %arg5: memref<1x128xf32, #tpu.memory_space<vmem>>, %arg6: memref<1x128xf32, #tpu.memory_space<vmem>>) attributes {dimension_semantics = [#tpu.dimension_semantics<parallel>, #tpu.dimension_semantics<arbitrary>], iteration_bounds = array<i64: 1, 1>, scalar_prefetch = 0 : i64, scratch_operands = 2 : i64, tpu.core_type = #tpu.core_type<tc>, window_params = [{transform_indices = @transform_0, window_bounds = array<i64: 8, 128>}, {transform_indices = @transform_1, window_bounds = array<i64: 128, 128>}, {transform_indices = @transform_2, window_bounds = array<i64: 1, 128>}]} {
    %c0_i32 = arith.constant 0 : i32
    %0 = arith.cmpi eq, %arg1, %c0_i32 : i32
    %1 = arith.extui %0 : i1 to i32
    %c0_i32_0 = arith.constant 0 : i32
    %2 = arith.cmpi ne, %1, %c0_i32_0 : i32
    scf.if %2 {
      %cst_20 = arith.constant -1.000000e+30 : f32
      %48 = vector.broadcast %cst_20 : f32 to vector<1x128xf32>
      %c0_21 = arith.constant 0 : index
      %c0_22 = arith.constant 0 : index
      %49 = vector.load %arg5[%c0_21, %c0_22] : memref<1x128xf32, #tpu.memory_space<vmem>>, vector<1x128xf32>
      tpu.vector_store %arg5[%c0_21, %c0_22], %48 {strides = array<i32>} : memref<1x128xf32, #tpu.memory_space<vmem>>, vector<1x128xf32>,
      %cst_23 = arith.constant 0.000000e+00 : f32
      %50 = vector.broadcast %cst_23 : f32 to vector<1x128xf32>
      %c0_24 = arith.constant 0 : index
      %c0_25 = arith.constant 0 : index
      %51 = vector.load %arg6[%c0_24, %c0_25] : memref<1x128xf32, #tpu.memory_space<vmem>>, vector<1x128xf32>
      tpu.vector_store %arg6[%c0_24, %c0_25], %50 {strides = array<i32>} : memref<1x128xf32, #tpu.memory_space<vmem>>, vector<1x128xf32>,
    } else {
    }
    %c0 = arith.constant 0 : index
    %c0_1 = arith.constant 0 : index
    %3 = vector.load %arg2[%c0, %c0_1] : memref<8x128xf32, #tpu.memory_space<vmem>>, vector<8x128xf32>
    %4 = vector.extract_strided_slice %3 {offsets = [0, 0], sizes = [1, 128], strides = [1, 1]} : vector<8x128xf32> to vector<1x128xf32>
    %5 = vector.extract_strided_slice %3 {offsets = [1, 0], sizes = [1, 128], strides = [1, 1]} : vector<8x128xf32> to vector<1x128xf32>
    %6 = vector.extract_strided_slice %3 {offsets = [3, 0], sizes = [1, 128], strides = [1, 1]} : vector<8x128xf32> to vector<1x128xf32>
    %c0_2 = arith.constant 0 : index
    %c0_3 = arith.constant 0 : index
    %7 = vector.load %arg3[%c0_2, %c0_3] : memref<128x128xf32, #tpu.memory_space<vmem>>, vector<128x128xf32>
    %8 = math.absf %7 : vector<128x128xf32>
    %9 = vector.broadcast %6 : vector<1x128xf32> to vector<128x128xf32>
    %10 = arith.mulf %9, %8 : vector<128x128xf32>
    %11 = math.tanh %10 : vector<128x128xf32>
    %cst = arith.constant 9.998000e-01 : f32
    %12 = vector.broadcast %cst : f32 to vector<128x128xf32>
    %13 = arith.mulf %12, %11 : vector<128x128xf32>
    %cst_4 = arith.constant 9.99999974E-5 : f32
    %14 = vector.broadcast %cst_4 : f32 to vector<128x128xf32>
    %15 = arith.addf %14, %13 : vector<128x128xf32>
    %cst_5 = arith.constant 1.000000e+00 : f32
    %16 = vector.broadcast %cst_5 : f32 to vector<128x128xf32>
    %17 = arith.subf %16, %11 : vector<128x128xf32>
    %cst_6 = arith.constant 9.998000e-01 : f32
    %18 = vector.broadcast %cst_6 : f32 to vector<128x128xf32>
    %19 = arith.mulf %18, %17 : vector<128x128xf32>
    %cst_7 = arith.constant 9.99999974E-5 : f32
    %20 = vector.broadcast %cst_7 : f32 to vector<128x128xf32>
    %21 = arith.addf %20, %19 : vector<128x128xf32>
    %22 = math.log %15 : vector<128x128xf32>
    %23 = vector.broadcast %4 : vector<1x128xf32> to vector<128x128xf32>
    %24 = arith.mulf %23, %22 : vector<128x128xf32>
    %25 = math.log %21 : vector<128x128xf32>
    %26 = vector.broadcast %5 : vector<1x128xf32> to vector<128x128xf32>
    %27 = arith.mulf %26, %25 : vector<128x128xf32>
    %28 = arith.addf %24, %27 : vector<128x128xf32>
    %c0_8 = arith.constant 0 : index
    %c0_9 = arith.constant 0 : index
    %29 = vector.load %arg5[%c0_8, %c0_9] : memref<1x128xf32, #tpu.memory_space<vmem>>, vector<1x128xf32>
    %cst_10 = arith.constant dense<0xFF800000> : vector<128xf32>
    %30 = vector.multi_reduction <maximumf>, %28, %cst_10 [0] : vector<128x128xf32> to vector<128xf32>
    %31 = vector.shape_cast %30 : vector<128xf32> to vector<1x128xf32>
    %32 = arith.maximumf %29, %31 : vector<1x128xf32>
    %33 = arith.subf %29, %32 : vector<1x128xf32>
    %34 = math.exp %33 : vector<1x128xf32>
    %c0_11 = arith.constant 0 : index
    %c0_12 = arith.constant 0 : index
    %35 = vector.load %arg6[%c0_11, %c0_12] : memref<1x128xf32, #tpu.memory_space<vmem>>, vector<1x128xf32>
    %36 = arith.mulf %34, %35 : vector<1x128xf32>
    %37 = vector.broadcast %32 : vector<1x128xf32> to vector<128x128xf32>
    %38 = arith.subf %28, %37 : vector<128x128xf32>
    %39 = math.exp %38 : vector<128x128xf32>
    %cst_13 = arith.constant dense<0.000000e+00> : vector<128xf32>
    %40 = vector.multi_reduction <add>, %39, %cst_13 [0] : vector<128x128xf32> to vector<128xf32>
    %41 = vector.shape_cast %40 : vector<128xf32> to vector<1x128xf32>
    %42 = arith.addf %36, %41 : vector<1x128xf32>
    %c0_14 = arith.constant 0 : index
    %c0_15 = arith.constant 0 : index
    %43 = vector.load %arg6[%c0_14, %c0_15] : memref<1x128xf32, #tpu.memory_space<vmem>>, vector<1x128xf32>
    tpu.vector_store %arg6[%c0_14, %c0_15], %42 {strides = array<i32>} : memref<1x128xf32, #tpu.memory_space<vmem>>, vector<1x128xf32>,
    %c0_16 = arith.constant 0 : index
    %c0_17 = arith.constant 0 : index
    %44 = vector.load %arg5[%c0_16, %c0_17] : memref<1x128xf32, #tpu.memory_space<vmem>>, vector<1x128xf32>
    tpu.vector_store %arg5[%c0_16, %c0_17], %32 {strides = array<i32>} : memref<1x128xf32, #tpu.memory_space<vmem>>, vector<1x128xf32>,
    %c0_i32_18 = arith.constant 0 : i32
    %45 = arith.cmpi eq, %arg1, %c0_i32_18 : i32
    %46 = arith.extui %45 : i1 to i32
    %c0_i32_19 = arith.constant 0 : i32
    %47 = arith.cmpi ne, %46, %c0_i32_19 : i32
    scf.if %47 {
      %c2 = arith.constant 2 : index
      %c0_20 = arith.constant 0 : index
      %48 = vector.load %arg2[%c2, %c0_20] : memref<8x128xf32, #tpu.memory_space<vmem>>, vector<1x128xf32>
      %c0_21 = arith.constant 0 : index
      %c0_22 = arith.constant 0 : index
      %49 = vector.load %arg5[%c0_21, %c0_22] : memref<1x128xf32, #tpu.memory_space<vmem>>, vector<1x128xf32>
      %50 = arith.addf %48, %49 : vector<1x128xf32>
      %c0_23 = arith.constant 0 : index
      %c0_24 = arith.constant 0 : index
      %51 = vector.load %arg6[%c0_23, %c0_24] : memref<1x128xf32, #tpu.memory_space<vmem>>, vector<1x128xf32>
      %52 = math.log %51 : vector<1x128xf32>
      %53 = arith.addf %50, %52 : vector<1x128xf32>
      %c0_25 = arith.constant 0 : index
      %c0_26 = arith.constant 0 : index
      %54 = vector.load %arg4[%c0_25, %c0_26] : memref<1x128xf32, #tpu.memory_space<vmem>>, vector<1x128xf32>
      tpu.vector_store %arg4[%c0_25, %c0_26], %53 {strides = array<i32>} : memref<1x128xf32, #tpu.memory_space<vmem>>, vector<1x128xf32>,
    } else {
    }
    return
  }
  func.func @transform_0(%arg0: i32, %arg1: i32) -> (i32, i32) {
    %c0_i32 = arith.constant 0 : i32
    %c0_i32_0 = arith.constant 0 : i32
    return %c0_i32, %arg0 : i32, i32
  }
  func.func @transform_1(%arg0: i32, %arg1: i32) -> (i32, i32) {
    %c0_i32 = arith.constant 0 : i32
    return %arg1, %arg0 : i32, i32
  }
  func.func @transform_2(%arg0: i32, %arg1: i32) -> (i32, i32) {
    %c0_i32 = arith.constant 0 : i32
    %c0_i32_0 = arith.constant 0 : i32
    return %c0_i32, %arg0 : i32, i32
  }
}

</mosaic_0001>

<llo_original>
// kernel: tpu_custom_call.1
$region0: #{tpu_custom_call.1}
  #allocation0 [shape = 'u32[]', space=smem, size = 0x4, offset = 0x4, fixed_abs, tag = 'smem constant byte address 0x4 - core index']
  #allocation1 [shape = 'u32[144,128]{1,0:T(1,128)}', space=vmem, size = 0x12000, scoped, tag = 'internal scratch']
  #allocation2 [shape = 'f32[1,128]{1,0:T(1,128)}', space=vmem, size = 0x200, scoped, tag = 'scratch operand']
  #allocation3 [shape = 'f32[1,128]{1,0:T(1,128)}', space=vmem, size = 0x200, scoped, tag = 'scratch operand']
  %s0 = inlined_call_operand.hbm [shape: f32[8,128], index: 0, kind: input, shape index: {}]
  %s1 = inlined_call_operand.hbm [shape: f32[128,128], index: 1, kind: input, shape index: {}]
  %s2 = inlined_call_operand.hbm [shape: f32[1,128], index: 2, kind: output, shape index: {}]
  %s3 = sld [smem:[#allocation0]]
  $region34: #{tpu_custom_call.1} parent=0
    _
  %s5 = ssub.s32 1, %s3
  %s6 = scalar_select 0, %s5, %s3
  $region1: #{tpu_custom_call.1} parent=0
    #allocation4 [shape = 'u8[4096]{0}', space=vmem, size = 0x1000, scoped, tag = 'input window, operand 0, single buffered']
    #allocation5 [shape = 's32[1]{0}', space=sflag, size = 0x4, scoped, tag = 'scoped memory for tpu_custom_call.1']
    #allocation6 [shape = 's32[1]{0}', space=sflag, size = 0x4, scoped, tag = 'scoped memory for tpu_custom_call.1']
    #allocation7 [shape = 'u8[65536]{0}', space=vmem, size = 0x10000, scoped, tag = 'input window, operand 1, single buffered']
    #allocation8 [shape = 's32[1]{0}', space=sflag, size = 0x4, scoped, tag = 'scoped memory for tpu_custom_call.1']
    #allocation9 [shape = 'u8[512]{0}', space=vmem, size = 0x400, scoped, tag = 'output window, operand 0, single buffered']
    %7 = vsyncpa [#allocation5], 0
    %8 = vsyncpa [#allocation8], 0
    %9 = vsyncpa [#allocation6], 0
    // Predicated region
    $region2: #{tpu_custom_call.1} parent=1 // pred_check
      _
    $region3: #{tpu_custom_call.1} parent=1 // pred_check_branch
      %11 = sbr.rel (0) target = $region5
    $region4: #{tpu_custom_call.1} parent=1 // pred_region
      %s13 = ssub.s32 128, 128
      %14 = vsyncadd [#allocation5], %s13
      %s16 = sshll.u32 [#allocation4], 4
      %s17 = int_to_ptr.vmem [resolvable:$true] %s16
      %19 = dma.hbm_to_vmem [thread:$0]  %s0, 128, %s17, [#allocation5]
    $region5: #{tpu_custom_call.1} parent=1 // pred_fallthru
      _
    // Predicated region
    $region6: #{tpu_custom_call.1} parent=1 // pred_check
      _
    $region7: #{tpu_custom_call.1} parent=1 // pred_check_branch
      %21 = sbr.rel (0) target = $region9
    $region8: #{tpu_custom_call.1} parent=1 // pred_region
      %s23 = ssub.s32 2048, 2048
      %24 = vsyncadd [#allocation8], %s23
      %s25 = sshll.u32 [#allocation7], 4
      %s26 = int_to_ptr.vmem [resolvable:$true] %s25
      %31 = dma.hbm_to_vmem [thread:$0]  %s1, 2048, %s26, [#allocation8], 128, 128, 8
    $region9: #{tpu_custom_call.1} parent=1 // pred_fallthru
      _
    // Predicated region
    $region10: #{tpu_custom_call.1} parent=1 // pred_check
      _
    $region11: #{tpu_custom_call.1} parent=1 // pred_check_branch
      %33 = sbr.rel (0) target = $region13
    $region12: #{tpu_custom_call.1} parent=1 // pred_region
      %34 = dma.done [#allocation5], 128
    $region13: #{tpu_custom_call.1} parent=1 // pred_fallthru
      _
    // Predicated region
    $region14: #{tpu_custom_call.1} parent=1 // pred_check
      _
    $region15: #{tpu_custom_call.1} parent=1 // pred_check_branch
      %36 = sbr.rel (0) target = $region17
    $region16: #{tpu_custom_call.1} parent=1 // pred_region
      %37 = dma.done [#allocation8], 2048
    $region17: #{tpu_custom_call.1} parent=1 // pred_fallthru
      _
    %p38 = scmp.eq.s32.totalorder 0, 0
    // Predicated region
    $region18: #{tpu_custom_call.1} parent=1 // pred_check
      %p39 = pneg %p38
    $region19: #{tpu_custom_call.1} parent=1 // pred_check_branch
      %41 = sbr.rel (%p39) target = $region21
    $region20: #{tpu_custom_call.1} parent=1 // pred_region
      %42 = vst [vmem:[#allocation2] sm:$0x1] -1e+30
      %43 = vst [vmem:[#allocation3] sm:$0x1] 0.0
    $region21: #{tpu_custom_call.1} parent=1 // pred_fallthru
      _
    %v44 = vld [vmem:[#allocation4] sm:$0xff]
    %v45 = vld [vmem:[#allocation7] sm:$0xff]
    %v46 = vld [vmem:[#allocation7 + $0x8] sm:$0xff]
    %v47 = vld [vmem:[#allocation7 + $0x10] sm:$0xff]
    %v48 = vld [vmem:[#allocation7 + $0x18] sm:$0xff]
    %v49 = vld [vmem:[#allocation7 + $0x20] sm:$0xff]
    %v50 = vld [vmem:[#allocation7 + $0x28] sm:$0xff]
    %v51 = vld [vmem:[#allocation7 + $0x30] sm:$0xff]
    %v52 = vld [vmem:[#allocation7 + $0x38] sm:$0xff]
    %v53 = vld [vmem:[#allocation7 + $0x40] sm:$0xff]
    %v54 = vld [vmem:[#allocation7 + $0x48] sm:$0xff]
    %v55 = vld [vmem:[#allocation7 + $0x50] sm:$0xff]
    %v56 = vld [vmem:[#allocation7 + $0x58] sm:$0xff]
    %v57 = vld [vmem:[#allocation7 + $0x60] sm:$0xff]
    %v58 = vld [vmem:[#allocation7 + $0x68] sm:$0xff]
    %v59 = vld [vmem:[#allocation7 + $0x70] sm:$0xff]
    %v60 = vld [vmem:[#allocation7 + $0x78] sm:$0xff]
    %v61 = vand.u32 2147483647, %v45
    %v62 = vand.u32 2147483647, %v46
    %v63 = vand.u32 2147483647, %v47
    %v64 = vand.u32 2147483647, %v48
    %v65 = vand.u32 2147483647, %v49
    %v66 = vand.u32 2147483647, %v50
    %v67 = vand.u32 2147483647, %v51
    %v68 = vand.u32 2147483647, %v52
    %v69 = vand.u32 2147483647, %v53
    %v70 = vand.u32 2147483647, %v54
    %v71 = vand.u32 2147483647, %v55
    %v72 = vand.u32 2147483647, %v56
    %v73 = vand.u32 2147483647, %v57
    %v74 = vand.u32 2147483647, %v58
    %v75 = vand.u32 2147483647, %v59
    %v76 = vand.u32 2147483647, %v60
    %v77 = vlaneseq
    %v78 = vshrl.u32 %v77, 7
    %v79 = vsub.s32 3, %v78
    %v80 = vrot.slane %v44, %v79
    %v81 = vmul.f32 %v80, %v61
    %v82 = vmul.f32 %v80, %v62
    %v83 = vmul.f32 %v80, %v63
    %v84 = vmul.f32 %v80, %v64
    %v85 = vmul.f32 %v80, %v65
    %v86 = vmul.f32 %v80, %v66
    %v87 = vmul.f32 %v80, %v67
    %v88 = vmul.f32 %v80, %v68
    %v89 = vmul.f32 %v80, %v69
    %v90 = vmul.f32 %v80, %v70
    %v91 = vmul.f32 %v80, %v71
    %v92 = vmul.f32 %v80, %v72
    %v93 = vmul.f32 %v80, %v73
    %v94 = vmul.f32 %v80, %v74
    %v95 = vmul.f32 %v80, %v75
    %v96 = vmul.f32 %v80, %v76
    %v97 = vtanh.pop %v81
    %v98 = vtanh.pop %v82
    %v99 = vtanh.pop %v83
    %v100 = vtanh.pop %v84
    %v101 = vtanh.pop %v85
    %v102 = vtanh.pop %v86
    %v103 = vtanh.pop %v87
    %v104 = vtanh.pop %v88
    %v105 = vtanh.pop %v89
    %v106 = vtanh.pop %v90
    %v107 = vtanh.pop %v91
    %v108 = vtanh.pop %v92
    %v109 = vtanh.pop %v93
    %v110 = vtanh.pop %v94
    %v111 = vtanh.pop %v95
    %v112 = vtanh.pop %v96
    %v113 = vmul.f32 %v97, 0.9998
    %v114 = vmul.f32 %v98, 0.9998
    %v115 = vmul.f32 %v99, 0.9998
    %v116 = vmul.f32 %v100, 0.9998
    %v117 = vmul.f32 %v101, 0.9998
    %v118 = vmul.f32 %v102, 0.9998
    %v119 = vmul.f32 %v103, 0.9998
    %v120 = vmul.f32 %v104, 0.9998
    %v121 = vmul.f32 %v105, 0.9998
    %v122 = vmul.f32 %v106, 0.9998
    %v123 = vmul.f32 %v107, 0.9998
    %v124 = vmul.f32 %v108, 0.9998
    %v125 = vmul.f32 %v109, 0.9998
    %v126 = vmul.f32 %v110, 0.9998
    %v127 = vmul.f32 %v111, 0.9998
    %v128 = vmul.f32 %v112, 0.9998
    %v129 = vadd.f32 %v113, 0.0001
    %v130 = vadd.f32 %v114, 0.0001
    %v131 = vadd.f32 %v115, 0.0001
    %v132 = vadd.f32 %v116, 0.0001
    %v133 = vadd.f32 %v117, 0.0001
    %v134 = vadd.f32 %v118, 0.0001
    %v135 = vadd.f32 %v119, 0.0001
    %v136 = vadd.f32 %v120, 0.0001
    %v137 = vadd.f32 %v121, 0.0001
    %v138 = vadd.f32 %v122, 0.0001
    %v139 = vadd.f32 %v123, 0.0001
    %v140 = vadd.f32 %v124, 0.0001
    %v141 = vadd.f32 %v125, 0.0001
    %v142 = vadd.f32 %v126, 0.0001
    %v143 = vadd.f32 %v127, 0.0001
    %v144 = vadd.f32 %v128, 0.0001
    %v145 = vsub.f32 1.0, %v97
    %v146 = vsub.f32 1.0, %v98
    %v147 = vsub.f32 1.0, %v99
    %v148 = vsub.f32 1.0, %v100
    %v149 = vsub.f32 1.0, %v101
    %v150 = vsub.f32 1.0, %v102
    %v151 = vsub.f32 1.0, %v103
    %v152 = vsub.f32 1.0, %v104
    %v153 = vsub.f32 1.0, %v105
    %v154 = vsub.f32 1.0, %v106
    %v155 = vsub.f32 1.0, %v107
    %v156 = vsub.f32 1.0, %v108
    %v157 = vsub.f32 1.0, %v109
    %v158 = vsub.f32 1.0, %v110
    %v159 = vsub.f32 1.0, %v111
    %v160 = vsub.f32 1.0, %v112
    %v161 = vmul.f32 %v145, 0.9998
    %v162 = vmul.f32 %v146, 0.9998
    %v163 = vmul.f32 %v147, 0.9998
    %v164 = vmul.f32 %v148, 0.9998
    %v165 = vmul.f32 %v149, 0.9998
    %v166 = vmul.f32 %v150, 0.9998
    %v167 = vmul.f32 %v151, 0.9998
    %v168 = vmul.f32 %v152, 0.9998
    %v169 = vmul.f32 %v153, 0.9998
    %v170 = vmul.f32 %v154, 0.9998
    %v171 = vmul.f32 %v155, 0.9998
    %v172 = vmul.f32 %v156, 0.9998
    %v173 = vmul.f32 %v157, 0.9998
    %v174 = vmul.f32 %v158, 0.9998
    %v175 = vmul.f32 %v159, 0.9998
    %v176 = vmul.f32 %v160, 0.9998
    %v177 = vadd.f32 %v161, 0.0001
    %v178 = vadd.f32 %v162, 0.0001
    %v179 = vadd.f32 %v163, 0.0001
    %v180 = vadd.f32 %v164, 0.0001
    %v181 = vadd.f32 %v165, 0.0001
    %v182 = vadd.f32 %v166, 0.0001
    %v183 = vadd.f32 %v167, 0.0001
    %v184 = vadd.f32 %v168, 0.0001
    %v185 = vadd.f32 %v169, 0.0001
    %v186 = vadd.f32 %v170, 0.0001
    %v187 = vadd.f32 %v171, 0.0001
    %v188 = vadd.f32 %v172, 0.0001
    %v189 = vadd.f32 %v173, 0.0001
    %v190 = vadd.f32 %v174, 0.0001
    %v191 = vadd.f32 %v175, 0.0001
    %v192 = vadd.f32 %v176, 0.0001
    %v193 = vlog2.pop %v129
    %v194 = vmul.f32 %v193, 0.6931472
    %v195 = vlog2.pop %v130
    %v196 = vmul.f32 %v195, 0.6931472
    %v197 = vlog2.pop %v131
    %v198 = vmul.f32 %v197, 0.6931472
    %v199 = vlog2.pop %v132
    %v200 = vmul.f32 %v199, 0.6931472
    %v201 = vlog2.pop %v133
    %v202 = vmul.f32 %v201, 0.6931472
    %v203 = vlog2.pop %v134
    %v204 = vmul.f32 %v203, 0.6931472
    %v205 = vlog2.pop %v135
    %v206 = vmul.f32 %v205, 0.6931472
    %v207 = vlog2.pop %v136
    %v208 = vmul.f32 %v207, 0.6931472
    %v209 = vlog2.pop %v137
    %v210 = vmul.f32 %v209, 0.6931472
    %v211 = vlog2.pop %v138
    %v212 = vmul.f32 %v211, 0.6931472
    %v213 = vlog2.pop %v139
    %v214 = vmul.f32 %v213, 0.6931472
    %v215 = vlog2.pop %v140
    %v216 = vmul.f32 %v215, 0.6931472
    %v217 = vlog2.pop %v141
    %v218 = vmul.f32 %v217, 0.6931472
    %v219 = vlog2.pop %v142
    %v220 = vmul.f32 %v219, 0.6931472
    %v221 = vlog2.pop %v143
    %v222 = vmul.f32 %v221, 0.6931472
    %v223 = vlog2.pop %v144
    %v224 = vmul.f32 %v223, 0.6931472
    %v225 = vlaneseq
    %v226 = vshrl.u32 %v225, 7
    %v227 = vsub.s32 0, %v226
    %v228 = vrot.slane %v44, %v227
    %v229 = vmul.f32 %v228, %v194
    %v230 = vmul.f32 %v228, %v196
    %v231 = vmul.f32 %v228, %v198
    %v232 = vmul.f32 %v228, %v200
    %v233 = vmul.f32 %v228, %v202
    %v234 = vmul.f32 %v228, %v204
    %v235 = vmul.f32 %v228, %v206
    %v236 = vmul.f32 %v228, %v208
    %v237 = vmul.f32 %v228, %v210
    %v238 = vmul.f32 %v228, %v212
    %v239 = vmul.f32 %v228, %v214
    %v240 = vmul.f32 %v228, %v216
    %v241 = vmul.f32 %v228, %v218
    %v242 = vmul.f32 %v228, %v220
    %v243 = vmul.f32 %v228, %v222
    %v244 = vmul.f32 %v228, %v224
    %v245 = vlog2.pop %v177
    %v246 = vmul.f32 %v245, 0.6931472
    %v247 = vlog2.pop %v178
    %v248 = vmul.f32 %v247, 0.6931472
    %v249 = vlog2.pop %v179
    %v250 = vmul.f32 %v249, 0.6931472
    %v251 = vlog2.pop %v180
    %v252 = vmul.f32 %v251, 0.6931472
    %v253 = vlog2.pop %v181
    %v254 = vmul.f32 %v253, 0.6931472
    %v255 = vlog2.pop %v182
    %v256 = vmul.f32 %v255, 0.6931472
    %v257 = vlog2.pop %v183
    %v258 = vmul.f32 %v257, 0.6931472
    %v259 = vlog2.pop %v184
    %v260 = vmul.f32 %v259, 0.6931472
    %v261 = vlog2.pop %v185
    %v262 = vmul.f32 %v261, 0.6931472
    %v263 = vlog2.pop %v186
    %v264 = vmul.f32 %v263, 0.6931472
    %v265 = vlog2.pop %v187
    %v266 = vmul.f32 %v265, 0.6931472
    %v267 = vlog2.pop %v188
    %v268 = vmul.f32 %v267, 0.6931472
    %v269 = vlog2.pop %v189
    %v270 = vmul.f32 %v269, 0.6931472
    %v271 = vlog2.pop %v190
    %v272 = vmul.f32 %v271, 0.6931472
    %v273 = vlog2.pop %v191
    %v274 = vmul.f32 %v273, 0.6931472
    %v275 = vlog2.pop %v192
    %v276 = vmul.f32 %v275, 0.6931472
    %v277 = vlaneseq
    %v278 = vshrl.u32 %v277, 7
    %v279 = vsub.s32 1, %v278
    %v280 = vrot.slane %v44, %v279
    %v281 = vmul.f32 %v280, %v246
    %v282 = vmul.f32 %v280, %v248
    %v283 = vmul.f32 %v280, %v250
    %v284 = vmul.f32 %v280, %v252
    %v285 = vmul.f32 %v280, %v254
    %v286 = vmul.f32 %v280, %v256
    %v287 = vmul.f32 %v280, %v258
    %v288 = vmul.f32 %v280, %v260
    %v289 = vmul.f32 %v280, %v262
    %v290 = vmul.f32 %v280, %v264
    %v291 = vmul.f32 %v280, %v266
    %v292 = vmul.f32 %v280, %v268
    %v293 = vmul.f32 %v280, %v270
    %v294 = vmul.f32 %v280, %v272
    %v295 = vmul.f32 %v280, %v274
    %v296 = vmul.f32 %v280, %v276
    %v297 = vadd.f32 %v229, %v281
    %v298 = vadd.f32 %v230, %v282
    %v299 = vadd.f32 %v231, %v283
    %v300 = vadd.f32 %v232, %v284
    %v301 = vadd.f32 %v233, %v285
    %v302 = vadd.f32 %v234, %v286
    %v303 = vadd.f32 %v235, %v287
    %v304 = vadd.f32 %v236, %v288
    %v305 = vadd.f32 %v237, %v289
    %v306 = vadd.f32 %v238, %v290
    %v307 = vadd.f32 %v239, %v291
    %v308 = vadd.f32 %v240, %v292
    %v309 = vadd.f32 %v241, %v293
    %v310 = vadd.f32 %v242, %v294
    %v311 = vadd.f32 %v243, %v295
    %v312 = vadd.f32 %v244, %v296
    %v313 = vld [vmem:[#allocation2] sm:$0x1]
    %v314 = vmax.f32 %v297, %v301
    %v315 = vmax.f32 %v298, %v302
    %v316 = vmax.f32 %v299, %v303
    %v317 = vmax.f32 %v300, %v304
    %v318 = vmax.f32 %v314, %v305
    %v319 = vmax.f32 %v315, %v306
    %v320 = vmax.f32 %v316, %v307
    %v321 = vmax.f32 %v317, %v308
    %v322 = vmax.f32 %v318, %v309
    %v323 = vmax.f32 %v319, %v310
    %v324 = vmax.f32 %v320, %v311
    %v325 = vmax.f32 %v321, %v312
    %v326 = vmax.f32 %v322, %v323
    %v327 = vmax.f32 %v324, %v325
    %v328 = vmax.f32 %v326, %v327
    %v329 = vrot.slane %v328, 4
    %v330 = vmax.f32 %v328, %v329
    %v331 = vrot.slane %v330, 2
    %v332 = vmax.f32 %v330, %v331
    %v333 = vrot.slane %v332, 1
    %v334 = vmax.f32 %v332, %v333
    %v335 = vmax.f32 %v313, %v334
    %v336 = vsub.f32 %v313, %v335
    %v337 = vmul.f32 %v336, 1.442695
    %v338 = vpow.pop %v337
    %v339 = vld [vmem:[#allocation3] sm:$0x1]
    %v340 = vmul.f32 %v338, %v339
    %v342 = vlaneseq
    %v343 = vshrl.u32 %v342, 7
    %v344 = vsub.s32 0, %v343
    %v345 = vrot.slane %v335, %v344
    %v347 = vsub.f32 %v297, %v345
    %v348 = vsub.f32 %v298, %v345
    %v349 = vsub.f32 %v299, %v345
    %v350 = vsub.f32 %v300, %v345
    %v351 = vsub.f32 %v301, %v345
    %v352 = vsub.f32 %v302, %v345
    %v353 = vsub.f32 %v303, %v345
    %v354 = vsub.f32 %v304, %v345
    %v355 = vsub.f32 %v305, %v345
    %v356 = vsub.f32 %v306, %v345
    %v357 = vsub.f32 %v307, %v345
    %v358 = vsub.f32 %v308, %v345
    %v359 = vsub.f32 %v309, %v345
    %v360 = vsub.f32 %v310, %v345
    %v361 = vsub.f32 %v311, %v345
    %v362 = vsub.f32 %v312, %v345
    %v363 = vmul.f32 %v347, 1.442695
    %v364 = vpow.pop %v363
    %v365 = vmul.f32 %v348, 1.442695
    %v366 = vpow.pop %v365
    %v367 = vmul.f32 %v349, 1.442695
    %v368 = vpow.pop %v367
    %v369 = vmul.f32 %v350, 1.442695
    %v370 = vpow.pop %v369
    %v371 = vmul.f32 %v351, 1.442695
    %v372 = vpow.pop %v371
    %v373 = vmul.f32 %v352, 1.442695
    %v374 = vpow.pop %v373
    %v375 = vmul.f32 %v353, 1.442695
    %v376 = vpow.pop %v375
    %v377 = vmul.f32 %v354, 1.442695
    %v378 = vpow.pop %v377
    %v379 = vmul.f32 %v355, 1.442695
    %v380 = vpow.pop %v379
    %v381 = vmul.f32 %v356, 1.442695
    %v382 = vpow.pop %v381
    %v383 = vmul.f32 %v357, 1.442695
    %v384 = vpow.pop %v383
    %v385 = vmul.f32 %v358, 1.442695
    %v386 = vpow.pop %v385
    %v387 = vmul.f32 %v359, 1.442695
    %v388 = vpow.pop %v387
    %v389 = vmul.f32 %v360, 1.442695
    %v390 = vpow.pop %v389
    %v391 = vmul.f32 %v361, 1.442695
    %v392 = vpow.pop %v391
    %v393 = vmul.f32 %v362, 1.442695
    %v394 = vpow.pop %v393
    %v395 = vadd.f32 %v364, %v366
    %v396 = vadd.f32 %v395, %v368
    %v397 = vadd.f32 %v396, %v370
    %v398 = vadd.f32 %v397, %v372
    %v399 = vadd.f32 %v398, %v374
    %v400 = vadd.f32 %v399, %v376
    %v401 = vadd.f32 %v400, %v378
    %v402 = vadd.f32 %v401, %v380
    %v403 = vadd.f32 %v402, %v382
    %v404 = vadd.f32 %v403, %v384
    %v405 = vadd.f32 %v404, %v386
    %v406 = vadd.f32 %v405, %v388
    %v407 = vadd.f32 %v406, %v390
    %v408 = vadd.f32 %v407, %v392
    %v409 = vadd.f32 %v408, %v394
    %v410 = vrot.slane %v409, 4
    %v411 = vadd.f32 %v409, %v410
    %v412 = vrot.slane %v411, 2
    %v413 = vadd.f32 %v411, %v412
    %v414 = vrot.slane %v413, 1
    %v415 = vadd.f32 %v413, %v414
    %v416 = vadd.f32 %v340, %v415
    %417 = vst [vmem:[#allocation3] sm:$0x1] %v416
    %418 = vst [vmem:[#allocation2] sm:$0x1] %v335
    // Predicated region
    $region22: #{tpu_custom_call.1} parent=1 // pred_check
      %p419 = pneg %p38
    $region23: #{tpu_custom_call.1} parent=1 // pred_check_branch
      %421 = sbr.rel (%p419) target = $region25
    $region24: #{tpu_custom_call.1} parent=1 // pred_region
      %v422 = vld [vmem:[#allocation4 + $0x2] sm:$0x1]
      %v423 = vld [vmem:[#allocation2] sm:$0x1]
      %v424 = vadd.f32 %v422, %v423
      %v425 = vld [vmem:[#allocation3] sm:$0x1]
      %v426 = vlog2.pop %v425
      %v427 = vmul.f32 %v426, 0.6931472
      %v428 = vadd.f32 %v424, %v427
      %429 = vst [vmem:[#allocation9] sm:$0x1] %v428
    $region25: #{tpu_custom_call.1} parent=1 // pred_fallthru
      _
    // Predicated region
    $region26: #{tpu_custom_call.1} parent=1 // pred_check
      _
    $region27: #{tpu_custom_call.1} parent=1 // pred_check_branch
      %431 = sbr.rel (0) target = $region29
    $region28: #{tpu_custom_call.1} parent=1 // pred_region
      %s433 = ssub.s32 16, 16
      %434 = vsyncadd [#allocation6], %s433
      %s436 = sshll.u32 [#allocation9], 4
      %s437 = int_to_ptr.vmem [resolvable:$true] %s436
      %439 = dma.vmem_to_hbm [thread:$0]  %s437, 16, %s2, [#allocation6]
    $region29: #{tpu_custom_call.1} parent=1 // pred_fallthru
      _
    // Predicated region
    $region30: #{tpu_custom_call.1} parent=1 // pred_check
      _
    $region31: #{tpu_custom_call.1} parent=1 // pred_check_branch
      %441 = sbr.rel (0) target = $region33
    $region32: #{tpu_custom_call.1} parent=1 // pred_region
      %442 = dma.done [#allocation6], 16
    $region33: #{tpu_custom_call.1} parent=1 // pred_fallthru
      _
    %443 = vsyncpa [#allocation5], 1
    %444 = vsyncpa [#allocation8], 1
    %445 = vsyncpa [#allocation6], 1

</llo_original>
